<compile_context>
chip_gen: v6e
topology: v6e:2x2x1
jax: 0.10.0
libtpu: 0.0.40
codegen_flags: <defaults>
</compile_context>

<pallas_src>
import functools

import jax
import jax.numpy as jnp
from jax.experimental import pallas as pl
from jax.experimental.pallas import tpu as pltpu

HIDDEN = 64
HIDDEN_PAD = 128   # full MXU / lane width
LANE = 128


def _round_up(n, m):
    return (n + m - 1) // m * m


def dqn_mlp_kernel(x_ref, w1_ref, b1_ref, w2_ref, b2_ref, w3_ref, b3_ref, out_ref):
    # Fused forward for one batch tile: 3 matmuls + bias + ReLU.
    # bf16 operands on the MXU, f32 accumulation / elementwise.
    x = x_ref[...].astype(jnp.bfloat16)

    h1 = jnp.dot(x, w1_ref[...], preferred_element_type=jnp.float32) + b1_ref[...]
    h1 = jnp.maximum(h1, 0.0)

    h2 = jnp.dot(h1.astype(jnp.bfloat16), w2_ref[...],
                 preferred_element_type=jnp.float32) + b2_ref[...]
    h2 = jnp.maximum(h2, 0.0)

    out = jnp.dot(h2.astype(jnp.bfloat16), w3_ref[...],
                  preferred_element_type=jnp.float32) + b3_ref[...]
    out_ref[...] = out.astype(out_ref.dtype)


def pad_dqn_params(params):
    """One-time prep: pad hidden 64->128, output -> multiple of 128; cast weights bf16.

    Padded hidden activations are ReLU(x @ 0 + 0) = 0, so the extra rows of w2/w3
    contribute nothing -> identical forward semantics.
    """
    w1, b1, w2, b2, w3, b3 = (params["w1"], params["b1"], params["w2"],
                              params["b2"], params["w3"], params["b3"])
    H = w1.shape[1]
    HP = HIDDEN_PAD
    out_dim = w3.shape[1]
    OP = _round_up(out_dim, LANE)

    padded = {
        "w1": jnp.pad(w1, ((0, 0), (0, HP - H))).astype(jnp.bfloat16),
        "b1": jnp.pad(b1, ((0, 0), (0, HP - H))).astype(jnp.float32),
        "w2": jnp.pad(w2, ((0, HP - H), (0, HP - H))).astype(jnp.bfloat16),
        "b2": jnp.pad(b2, ((0, 0), (0, HP - H))).astype(jnp.float32),
        "w3": jnp.pad(w3, ((0, HP - H), (0, OP - out_dim))).astype(jnp.bfloat16),
        "b3": jnp.pad(b3, ((0, 0), (0, OP - out_dim))).astype(jnp.float32),
    }
    return padded, out_dim


@functools.partial(jax.jit, static_argnames=("out_dim", "max_block_b"))
def dqn_forward(x, padded_params, *, out_dim, max_block_b=1024):
    """x: [B, input_dim] float32. padded_params: output of pad_dqn_params."""
    p = padded_params
    B, input_dim = x.shape
    HP = HIDDEN_PAD
    OP = p["w3"].shape[1]

    # Batch tile: big enough to amortize per-grid-step overhead, sublane-aligned.
    # TB=1024 -> x tile 64 KiB, out tile 512 KiB, weights ~45 KiB; well under the
    # 32 MiB scoped-VMEM default even with double buffering on all chips.
    TB = min(max_block_b, _round_up(B, 8))
    B_pad = _round_up(B, TB)
    if B_pad != B:
        x = jnp.pad(x, ((0, B_pad - B), (0, 0)))
    grid = (B_pad // TB,)

    const = lambda i: (0, 0)   # weights/biases: same block every step -> stay resident
    flops = 2 * B_pad * (input_dim * HP + HP * HP + HP * OP)
    bytes_accessed = (B_pad * input_dim * 4 + B_pad * OP * 4
                      + (p["w1"].size + p["w2"].size + p["w3"].size) * 2
                      + (p["b1"].size + p["b2"].size + p["b3"].size) * 4)

    out_padded = pl.pallas_call(
        dqn_mlp_kernel,
        out_shape=jax.ShapeDtypeStruct((B_pad, OP), jnp.float32),
        grid=grid,
        in_specs=[
            pl.BlockSpec((TB, input_dim), lambda i: (i, 0)),
            pl.BlockSpec((input_dim, HP), const),
            pl.BlockSpec((1, HP), const),
            pl.BlockSpec((HP, HP), const),
            pl.BlockSpec((1, HP), const),
            pl.BlockSpec((HP, OP), const),
            pl.BlockSpec((1, OP), const),
        ],
        out_specs=pl.BlockSpec((TB, OP), lambda i: (i, 0)),
        compiler_params=pltpu.CompilerParams(
            dimension_semantics=("parallel",)),
        cost_estimate=pl.CostEstimate(
            flops=flops, transcendentals=0, bytes_accessed=bytes_accessed),
    )(x, p["w1"], p["b1"], p["w2"], p["b2"], p["w3"], p["b3"])

    return out_padded[:B, :out_dim]


def init_dqn_params(key, input_dim, output_dim, hidden=HIDDEN):
    """Deterministic synthetic init (uniform like PyTorch's default Linear init)."""
    ks = jax.random.split(key, 6)

    def linear(kw, kb, fan_in, fan_out):
        bound = 1.0 / jnp.sqrt(float(fan_in))
        w = jax.random.uniform(kw, (fan_in, fan_out), jnp.float32, -bound, bound)
        b = jax.random.uniform(kb, (1, fan_out), jnp.float32, -bound, bound)
        return w, b

    w1, b1 = linear(ks[0], ks[1], input_dim, hidden)
    w2, b2 = linear(ks[2], ks[3], hidden, hidden)
    w3, b3 = linear(ks[4], ks[5], hidden, output_dim)
    return {"w1": w1, "b1": b1, "w2": w2, "b2": b2, "w3": w3, "b3": b3}


def dqn_forward_ref(x, p):
    h1 = jnp.maximum(x @ p["w1"] + p["b1"], 0.0)
    h2 = jnp.maximum(h1 @ p["w2"] + p["b2"], 0.0)
    return h2 @ p["w3"] + p["b3"]


if __name__ == "__main__":
    key = jax.random.PRNGKey(0)
    k_param, k_x = jax.random.split(key)

    batch, input_dim, output_dim = 8, 16, 4
    params = init_dqn_params(k_param, input_dim, output_dim)
    x = jax.random.normal(k_x, (batch, input_dim), jnp.float32)

    padded_params, out_dim = pad_dqn_params(params)
    out = dqn_forward(x, padded_params, out_dim=out_dim)
    out = jax.block_until_ready(out)

    ref = dqn_forward_ref(x, params)
    assert out.shape == (batch, output_dim)
    # bf16 MXU operands -> looser tolerance than a pure-f32 matmul.
    assert jnp.allclose(out, ref, atol=5e-2, rtol=5e-2), (
        f"max abs err = {jnp.max(jnp.abs(out - ref))}")

    print("KERNEL_OK")
</pallas_src>

<mosaic_0001>
module attributes {stable_mosaic.version = 11 : i64} {
  func.func @dqn_mlp_kernel(%arg0: i32, %arg1: memref<8x16xf32, #tpu.memory_space<vmem>>, %arg2: memref<16x128xbf16, #tpu.memory_space<vmem>>, %arg3: memref<1x128xf32, #tpu.memory_space<vmem>>, %arg4: memref<128x128xbf16, #tpu.memory_space<vmem>>, %arg5: memref<1x128xf32, #tpu.memory_space<vmem>>, %arg6: memref<128x128xbf16, #tpu.memory_space<vmem>>, %arg7: memref<1x128xf32, #tpu.memory_space<vmem>>, %arg8: memref<8x128xf32, #tpu.memory_space<vmem>>) attributes {dimension_semantics = [#tpu.dimension_semantics<parallel>], iteration_bounds = array<i64: 1>, scalar_prefetch = 0 : i64, scratch_operands = 0 : i64, tpu.core_type = #tpu.core_type<tc>, window_params = [{transform_indices = @transform_0, window_bounds = array<i64: 8, 16>}, {pipeline_mode = #tpu.pipeline_mode<synchronous>, transform_indices = @transform_1, window_bounds = array<i64: 16, 128>}, {pipeline_mode = #tpu.pipeline_mode<synchronous>, transform_indices = @transform_2, window_bounds = array<i64: 1, 128>}, {pipeline_mode = #tpu.pipeline_mode<synchronous>, transform_indices = @transform_3, window_bounds = array<i64: 128, 128>}, {pipeline_mode = #tpu.pipeline_mode<synchronous>, transform_indices = @transform_4, window_bounds = array<i64: 1, 128>}, {pipeline_mode = #tpu.pipeline_mode<synchronous>, transform_indices = @transform_5, window_bounds = array<i64: 128, 128>}, {pipeline_mode = #tpu.pipeline_mode<synchronous>, transform_indices = @transform_6, window_bounds = array<i64: 1, 128>}, {transform_indices = @transform_7, window_bounds = array<i64: 8, 128>}]} {
    %c0 = arith.constant 0 : index
    %c0_0 = arith.constant 0 : index
    %0 = vector.load %arg1[%c0, %c0_0] : memref<8x16xf32, #tpu.memory_space<vmem>>, vector<8x16xf32>
    %1 = arith.truncf %0 : vector<8x16xf32> to vector<8x16xbf16>
    %c0_1 = arith.constant 0 : index
    %c0_2 = arith.constant 0 : index
    %2 = vector.load %arg2[%c0_1, %c0_2] : memref<16x128xbf16, #tpu.memory_space<vmem>>, vector<16x128xbf16>
    %cst = arith.constant dense<0.000000e+00> : vector<8x128xf32>
    %3 = tpu.matmul %1, %2, %cst {dimension_numbers = #tpu.dot_dimension_numbers<[1], [0], [0], [1], [0, 0, 1, 1], [], []>} : vector<8x16xbf16>, vector<16x128xbf16>, vector<8x128xf32> -> vector<8x128xf32>
    %c0_3 = arith.constant 0 : index
    %c0_4 = arith.constant 0 : index
    %4 = vector.load %arg3[%c0_3, %c0_4] : memref<1x128xf32, #tpu.memory_space<vmem>>, vector<1x128xf32>
    %5 = vector.broadcast %4 : vector<1x128xf32> to vector<8x128xf32>
    %6 = arith.addf %3, %5 : vector<8x128xf32>
    %cst_5 = arith.constant 0.000000e+00 : f32
    %7 = vector.broadcast %cst_5 : f32 to vector<8x128xf32>
    %8 = arith.maximumf %6, %7 : vector<8x128xf32>
    %9 = arith.truncf %8 : vector<8x128xf32> to vector<8x128xbf16>
    %c0_6 = arith.constant 0 : index
    %c0_7 = arith.constant 0 : index
    %10 = vector.load %arg4[%c0_6, %c0_7] : memref<128x128xbf16, #tpu.memory_space<vmem>>, vector<128x128xbf16>
    %cst_8 = arith.constant dense<0.000000e+00> : vector<8x128xf32>
    %11 = tpu.matmul %9, %10, %cst_8 {dimension_numbers = #tpu.dot_dimension_numbers<[1], [0], [0], [1], [0, 0, 1, 1], [], []>} : vector<8x128xbf16>, vector<128x128xbf16>, vector<8x128xf32> -> vector<8x128xf32>
    %c0_9 = arith.constant 0 : index
    %c0_10 = arith.constant 0 : index
    %12 = vector.load %arg5[%c0_9, %c0_10] : memref<1x128xf32, #tpu.memory_space<vmem>>, vector<1x128xf32>
    %13 = vector.broadcast %12 : vector<1x128xf32> to vector<8x128xf32>
    %14 = arith.addf %11, %13 : vector<8x128xf32>
    %cst_11 = arith.constant 0.000000e+00 : f32
    %15 = vector.broadcast %cst_11 : f32 to vector<8x128xf32>
    %16 = arith.maximumf %14, %15 : vector<8x128xf32>
    %17 = arith.truncf %16 : vector<8x128xf32> to vector<8x128xbf16>
    %c0_12 = arith.constant 0 : index
    %c0_13 = arith.constant 0 : index
    %18 = vector.load %arg6[%c0_12, %c0_13] : memref<128x128xbf16, #tpu.memory_space<vmem>>, vector<128x128xbf16>
    %cst_14 = arith.constant dense<0.000000e+00> : vector<8x128xf32>
    %19 = tpu.matmul %17, %18, %cst_14 {dimension_numbers = #tpu.dot_dimension_numbers<[1], [0], [0], [1], [0, 0, 1, 1], [], []>} : vector<8x128xbf16>, vector<128x128xbf16>, vector<8x128xf32> -> vector<8x128xf32>
    %c0_15 = arith.constant 0 : index
    %c0_16 = arith.constant 0 : index
    %20 = vector.load %arg7[%c0_15, %c0_16] : memref<1x128xf32, #tpu.memory_space<vmem>>, vector<1x128xf32>
    %21 = vector.broadcast %20 : vector<1x128xf32> to vector<8x128xf32>
    %22 = arith.addf %19, %21 : vector<8x128xf32>
    %c0_17 = arith.constant 0 : index
    %c0_18 = arith.constant 0 : index
    %23 = vector.load %arg8[%c0_17, %c0_18] : memref<8x128xf32, #tpu.memory_space<vmem>>, vector<8x128xf32>
    tpu.vector_store %arg8[%c0_17, %c0_18], %22 {strides = array<i32>} : memref<8x128xf32, #tpu.memory_space<vmem>>, vector<8x128xf32>,
    return
  }
  func.func @transform_0(%arg0: i32) -> (i32, i32) {
    %c0_i32 = arith.constant 0 : i32
    %c0_i32_0 = arith.constant 0 : i32
    return %arg0, %c0_i32 : i32, i32
  }
  func.func @transform_1(%arg0: i32) -> (i32, i32) {
    %c0_i32 = arith.constant 0 : i32
    %c0_i32_0 = arith.constant 0 : i32
    %c0_i32_1 = arith.constant 0 : i32
    return %c0_i32, %c0_i32_0 : i32, i32
  }
  func.func @transform_2(%arg0: i32) -> (i32, i32) {
    %c0_i32 = arith.constant 0 : i32
    %c0_i32_0 = arith.constant 0 : i32
    %c0_i32_1 = arith.constant 0 : i32
    return %c0_i32, %c0_i32_0 : i32, i32
  }
  func.func @transform_3(%arg0: i32) -> (i32, i32) {
    %c0_i32 = arith.constant 0 : i32
    %c0_i32_0 = arith.constant 0 : i32
    %c0_i32_1 = arith.constant 0 : i32
    return %c0_i32, %c0_i32_0 : i32, i32
  }
  func.func @transform_4(%arg0: i32) -> (i32, i32) {
    %c0_i32 = arith.constant 0 : i32
    %c0_i32_0 = arith.constant 0 : i32
    %c0_i32_1 = arith.constant 0 : i32
    return %c0_i32, %c0_i32_0 : i32, i32
  }
  func.func @transform_5(%arg0: i32) -> (i32, i32) {
    %c0_i32 = arith.constant 0 : i32
    %c0_i32_0 = arith.constant 0 : i32
    %c0_i32_1 = arith.constant 0 : i32
    return %c0_i32, %c0_i32_0 : i32, i32
  }
  func.func @transform_6(%arg0: i32) -> (i32, i32) {
    %c0_i32 = arith.constant 0 : i32
    %c0_i32_0 = arith.constant 0 : i32
    %c0_i32_1 = arith.constant 0 : i32
    return %c0_i32, %c0_i32_0 : i32, i32
  }
  func.func @transform_7(%arg0: i32) -> (i32, i32) {
    %c0_i32 = arith.constant 0 : i32
    %c0_i32_0 = arith.constant 0 : i32
    return %arg0, %c0_i32 : i32, i32
  }
}

</mosaic_0001>

<llo_original>
// kernel: dqn_forward.1
$region0: #{dqn_forward.1}
  #allocation0 [shape = 'u32[]', space=smem, size = 0x4, offset = 0x4, fixed_abs, tag = 'smem constant byte address 0x4 - core index']
  #allocation1 [shape = 'u32[144,128]{1,0:T(1,128)}', space=vmem, size = 0x12000, scoped, tag = 'internal scratch']
  %s0 = inlined_call_operand.hbm [shape: f32[8,16], index: 0, kind: input, shape index: {}]
  %s1 = inlined_call_operand.hbm [shape: bf16[16,128], index: 1, kind: input, shape index: {}]
  %s2 = inlined_call_operand.vmem [shape: f32[1,128], index: 2, kind: input, shape index: {}]
  %s3 = inlined_call_operand.hbm [shape: bf16[128,128], index: 3, kind: input, shape index: {}]
  %s4 = inlined_call_operand.vmem [shape: f32[1,128], index: 4, kind: input, shape index: {}]
  %s5 = inlined_call_operand.hbm [shape: bf16[128,128], index: 5, kind: input, shape index: {}]
  %s6 = inlined_call_operand.vmem [shape: f32[1,128], index: 6, kind: input, shape index: {}]
  %s7 = inlined_call_operand.vmem [shape: f32[8,128], index: 7, kind: output, shape index: {}]
  %s8 = sld [smem:[#allocation0]]
  $region54: #{dqn_forward.1} parent=0
    _
  %s10 = ssub.s32 1, %s8
  %s11 = scalar_select 0, %s10, %s8
  $region1: #{dqn_forward.1} parent=0
    #allocation2 [shape = 'u8[4096]{0}', space=vmem, size = 0x1000, scoped, tag = 'input window, operand 0, single buffered']
    #allocation3 [shape = 's32[1]{0}', space=sflag, size = 0x4, scoped, tag = 'scoped memory for dqn_forward.1']
    #allocation4 [shape = 'u8[4096]{0}', space=vmem, size = 0x1000, scoped, tag = 'input window, operand 1, single buffered']
    #allocation5 [shape = 's32[1]{0}', space=sflag, size = 0x4, scoped, tag = 'scoped memory for dqn_forward.1']
    #allocation6 [shape = 'u8[32768]{0}', space=vmem, size = 0x8000, scoped, tag = 'input window, operand 3, single buffered']
    #allocation7 [shape = 'u8[32768]{0}', space=vmem, size = 0x8000, scoped, tag = 'input window, operand 5, single buffered']
    #allocation8 [shape = 's32[1]{0}', space=sflag, size = 0x4, scoped, tag = 'scoped memory for dqn_forward.1']
    %12 = vsyncpa [#allocation3], 0
    %13 = vsyncpa [#allocation5], 0
    %14 = vsyncpa [#allocation8], 0
    // Predicated region
    $region2: #{dqn_forward.1} parent=1 // pred_check
      _
    $region3: #{dqn_forward.1} parent=1 // pred_check_branch
      %16 = sbr.rel (0) target = $region5
    $region4: #{dqn_forward.1} parent=1 // pred_region
      %s18 = ssub.s32 128, 128
      %19 = vsyncadd [#allocation3], %s18
      %s21 = sshll.u32 [#allocation2], 4
      %s22 = int_to_ptr.vmem [resolvable:$true] %s21
      %24 = dma.hbm_to_vmem [thread:$0]  %s0, 128, %s22, [#allocation3]
    $region5: #{dqn_forward.1} parent=1 // pred_fallthru
      _
    // Predicated region
    $region6: #{dqn_forward.1} parent=1 // pred_check
      _
    $region7: #{dqn_forward.1} parent=1 // pred_check_branch
      %26 = sbr.rel (0) target = $region9
    $region8: #{dqn_forward.1} parent=1 // pred_region
      %s28 = ssub.s32 128, 128
      %29 = vsyncadd [#allocation5], %s28
      %s30 = sshll.u32 [#allocation4], 4
      %s31 = int_to_ptr.vmem [resolvable:$true] %s30
      %36 = dma.hbm_to_vmem [thread:$0]  %s1, 128, %s31, [#allocation5], 64, 64, 4
    $region9: #{dqn_forward.1} parent=1 // pred_fallthru
      _
    // Predicated region
    $region10: #{dqn_forward.1} parent=1 // pred_check
      _
    $region11: #{dqn_forward.1} parent=1 // pred_check_branch
      %38 = sbr.rel (0) target = $region13
    $region12: #{dqn_forward.1} parent=1 // pred_region
      _
    $region13: #{dqn_forward.1} parent=1 // pred_fallthru
      _
    // Predicated region
    $region14: #{dqn_forward.1} parent=1 // pred_check
      _
    $region15: #{dqn_forward.1} parent=1 // pred_check_branch
      %40 = sbr.rel (0) target = $region17
    $region16: #{dqn_forward.1} parent=1 // pred_region
      %s42 = ssub.s32 1024, 1024
      %43 = vsyncadd [#allocation5], %s42
      %s44 = sshll.u32 [#allocation6], 4
      %s45 = int_to_ptr.vmem [resolvable:$true] %s44
      %50 = dma.hbm_to_vmem [thread:$0]  %s3, 1024, %s45, [#allocation5], 64, 64, 4
    $region17: #{dqn_forward.1} parent=1 // pred_fallthru
      _
    // Predicated region
    $region18: #{dqn_forward.1} parent=1 // pred_check
      _
    $region19: #{dqn_forward.1} parent=1 // pred_check_branch
      %52 = sbr.rel (0) target = $region21
    $region20: #{dqn_forward.1} parent=1 // pred_region
      _
    $region21: #{dqn_forward.1} parent=1 // pred_fallthru
      _
    // Predicated region
    $region22: #{dqn_forward.1} parent=1 // pred_check
      _
    $region23: #{dqn_forward.1} parent=1 // pred_check_branch
      %54 = sbr.rel (0) target = $region25
    $region24: #{dqn_forward.1} parent=1 // pred_region
      %s56 = ssub.s32 1024, 1024
      %57 = vsyncadd [#allocation8], %s56
      %s58 = sshll.u32 [#allocation7], 4
      %s59 = int_to_ptr.vmem [resolvable:$true] %s58
      %64 = dma.hbm_to_vmem [thread:$0]  %s5, 1024, %s59, [#allocation8], 64, 64, 4
    $region25: #{dqn_forward.1} parent=1 // pred_fallthru
      _
    // Predicated region
    $region26: #{dqn_forward.1} parent=1 // pred_check
      _
    $region27: #{dqn_forward.1} parent=1 // pred_check_branch
      %66 = sbr.rel (0) target = $region29
    $region28: #{dqn_forward.1} parent=1 // pred_region
      _
    $region29: #{dqn_forward.1} parent=1 // pred_fallthru
      _
    // Predicated region
    $region30: #{dqn_forward.1} parent=1 // pred_check
      _
    $region31: #{dqn_forward.1} parent=1 // pred_check_branch
      %68 = sbr.rel (0) target = $region33
    $region32: #{dqn_forward.1} parent=1 // pred_region
      %69 = dma.done [#allocation3], 128
    $region33: #{dqn_forward.1} parent=1 // pred_fallthru
      _
    // Predicated region
    $region34: #{dqn_forward.1} parent=1 // pred_check
      _
    $region35: #{dqn_forward.1} parent=1 // pred_check_branch
      %71 = sbr.rel (0) target = $region37
    $region36: #{dqn_forward.1} parent=1 // pred_region
      %72 = dma.done [#allocation5], 128
    $region37: #{dqn_forward.1} parent=1 // pred_fallthru
      _
    // Predicated region
    $region38: #{dqn_forward.1} parent=1 // pred_check
      _
    $region39: #{dqn_forward.1} parent=1 // pred_check_branch
      %74 = sbr.rel (0) target = $region41
    $region40: #{dqn_forward.1} parent=1 // pred_region
      %75 = dma.done [#allocation5], 1024
    $region41: #{dqn_forward.1} parent=1 // pred_fallthru
      _
    // Predicated region
    $region42: #{dqn_forward.1} parent=1 // pred_check
      _
    $region43: #{dqn_forward.1} parent=1 // pred_check_branch
      %77 = sbr.rel (0) target = $region45
    $region44: #{dqn_forward.1} parent=1 // pred_region
      %78 = dma.done [#allocation8], 1024
    $region45: #{dqn_forward.1} parent=1 // pred_fallthru
      _
    %v80 = vld [vmem:[#allocation2] sm:$0xff]
    %v81 = vpack.c.bf16 %v80, %v80
    %v82 = vld [vmem:[#allocation4] sm:$0xf]
    %v83 = vld [vmem:[#allocation4 + $0x4] sm:$0xf]
    %v84 = vld [vmem:[%s2] sm:$0x1]
    %v86 = vlaneseq
    %v87 = vshrl.u32 %v86, 7
    %v88 = vsub.s32 0, %v87
    %v89 = vrot.slane %v84, %v88
    %v93 = vunpack.c.l.b16 %v82
    %v94 = vunpack.c.l.b16 %v83
    %v95 = vpack.c.b16 %v94, %v93
    %vm97 = vcmask 130048
    %v99 = vsel %vm97, %v81, 0
    %101 = vmatprep.subr.bf16.mxu0 0
    %102 = vmatpush1.bf16.msra.mxu0 0
    %103 = vmatprep.subr.bf16.mxu0 0
    %104 = vmatpush1.bf16.msra.mxu0 0
    %105 = vmatprep.subr.bf16.mxu0 0
    %106 = vmatpush1.bf16.msra.mxu0 0
    %107 = vmatprep.subr.bf16.mxu0 0
    %108 = vmatpush1.bf16.msra.mxu0 0
    %109 = vmatprep.subr.bf16.mxu0 0
    %110 = vmatpush1.bf16.msra.mxu0 0
    %111 = vmatprep.subr.bf16.mxu0 0
    %112 = vmatpush1.bf16.msra.mxu0 0
    %113 = vmatprep.subr.bf16.mxu0 0
    %114 = vmatpush1.bf16.msra.mxu0 0
    %115 = vmatprep.subr.bf16.mxu0 0
    %116 = vmatpush1.bf16.msra.mxu0 %v95
    %117 = vmatprep.subr.bf16.mxu0 0
    %118 = vmatpush2.bf16.msra.mxu0 0
    %119 = vmatprep.subr.bf16.mxu0 0
    %120 = vmatpush2.bf16.msra.mxu0 0
    %121 = vmatprep.subr.bf16.mxu0 0
    %122 = vmatpush2.bf16.msra.mxu0 0
    %123 = vmatprep.subr.bf16.mxu0 0
    %124 = vmatpush2.bf16.msra.mxu0 0
    %125 = vmatprep.subr.bf16.mxu0 0
    %126 = vmatpush2.bf16.msra.mxu0 0
    %127 = vmatprep.subr.bf16.mxu0 0
    %128 = vmatpush2.bf16.msra.mxu0 0
    %129 = vmatprep.subr.bf16.mxu0 0
    %130 = vmatpush2.bf16.msra.mxu0 0
    %131 = vmatprep.subr.bf16.mxu0 0
    %132 = vmatpush2.bf16.msra.mxu0 0
    %133 = vmatprep.mubr.bf16.mxu0 0
    %134 = vmatmul.mubr.bf16.gmra.mxu0 %v99
    %v135 = vpop.f32.mrf.mxu0
    %v136 = vadd.f32 %v89, %v135
    %v137 = vpop.f32.mrf.mxu0
    %v138 = vpop.f32.mrf.mxu0
    %v139 = vpop.f32.mrf.mxu0
    %140 = vdwg.mxu0
    %v141 = vmax.f32 %v136, 0.0
    %v142 = vpack.c.bf16 %v141, %v141
    %v143 = vld [vmem:[#allocation6] sm:$0xf]
    %v144 = vld [vmem:[#allocation6 + $0x4] sm:$0xf]
    %v145 = vld [vmem:[#allocation6 + $0x8] sm:$0xf]
    %v146 = vld [vmem:[#allocation6 + $0xc] sm:$0xf]
    %v147 = vld [vmem:[#allocation6 + $0x10] sm:$0xf]
    %v148 = vld [vmem:[#allocation6 + $0x14] sm:$0xf]
    %v149 = vld [vmem:[#allocation6 + $0x18] sm:$0xf]
    %v150 = vld [vmem:[#allocation6 + $0x1c] sm:$0xf]
    %v151 = vld [vmem:[#allocation6 + $0x20] sm:$0xf]
    %v152 = vld [vmem:[#allocation6 + $0x24] sm:$0xf]
    %v153 = vld [vmem:[#allocation6 + $0x28] sm:$0xf]
    %v154 = vld [vmem:[#allocation6 + $0x2c] sm:$0xf]
    %v155 = vld [vmem:[#allocation6 + $0x30] sm:$0xf]
    %v156 = vld [vmem:[#allocation6 + $0x34] sm:$0xf]
    %v157 = vld [vmem:[#allocation6 + $0x38] sm:$0xf]
    %v158 = vld [vmem:[#allocation6 + $0x3c] sm:$0xf]
    %v159 = vld [vmem:[%s4] sm:$0x1]
    %v161 = vlaneseq
    %v162 = vshrl.u32 %v161, 7
    %v163 = vsub.s32 0, %v162
    %v164 = vrot.slane %v159, %v163
    %v182 = vunpack.c.l.b16 %v143
    %v183 = vunpack.c.l.b16 %v144
    %v184 = vunpack.c.l.b16 %v145
    %v185 = vunpack.c.l.b16 %v146
    %v186 = vunpack.c.l.b16 %v147
    %v187 = vunpack.c.l.b16 %v148
    %v188 = vunpack.c.l.b16 %v149
    %v189 = vunpack.c.l.b16 %v150
    %v190 = vunpack.c.l.b16 %v151
    %v191 = vunpack.c.l.b16 %v152
    %v192 = vunpack.c.l.b16 %v153
    %v193 = vunpack.c.l.b16 %v154
    %v194 = vunpack.c.l.b16 %v155
    %v195 = vunpack.c.l.b16 %v156
    %v196 = vunpack.c.l.b16 %v157
    %v197 = vunpack.c.l.b16 %v158
    %v198 = vpack.c.b16 %v183, %v182
    %v199 = vpack.c.b16 %v185, %v184
    %v200 = vpack.c.b16 %v187, %v186
    %v201 = vpack.c.b16 %v189, %v188
    %v202 = vpack.c.b16 %v191, %v190
    %v203 = vpack.c.b16 %v193, %v192
    %v204 = vpack.c.b16 %v195, %v194
    %v205 = vpack.c.b16 %v197, %v196
    %214 = vmatprep.subr.bf16.mxu0 0
    %215 = vmatpush1.bf16.msra.mxu0 %v205
    %216 = vmatprep.subr.bf16.mxu0 0
    %217 = vmatpush1.bf16.msra.mxu0 %v204
    %218 = vmatprep.subr.bf16.mxu0 0
    %219 = vmatpush1.bf16.msra.mxu0 %v203
    %220 = vmatprep.subr.bf16.mxu0 0
    %221 = vmatpush1.bf16.msra.mxu0 %v202
    %222 = vmatprep.subr.bf16.mxu0 0
    %223 = vmatpush1.bf16.msra.mxu0 %v201
    %224 = vmatprep.subr.bf16.mxu0 0
    %225 = vmatpush1.bf16.msra.mxu0 %v200
    %226 = vmatprep.subr.bf16.mxu0 0
    %227 = vmatpush1.bf16.msra.mxu0 %v199
    %228 = vmatprep.subr.bf16.mxu0 0
    %229 = vmatpush1.bf16.msra.mxu0 %v198
    %230 = vmatprep.subr.bf16.mxu0 0
    %231 = vmatpush2.bf16.msra.mxu0 0
    %232 = vmatprep.subr.bf16.mxu0 0
    %233 = vmatpush2.bf16.msra.mxu0 0
    %234 = vmatprep.subr.bf16.mxu0 0
    %235 = vmatpush2.bf16.msra.mxu0 0
    %236 = vmatprep.subr.bf16.mxu0 0
    %237 = vmatpush2.bf16.msra.mxu0 0
    %238 = vmatprep.subr.bf16.mxu0 0
    %239 = vmatpush2.bf16.msra.mxu0 0
    %240 = vmatprep.subr.bf16.mxu0 0
    %241 = vmatpush2.bf16.msra.mxu0 0
    %242 = vmatprep.subr.bf16.mxu0 0
    %243 = vmatpush2.bf16.msra.mxu0 0
    %244 = vmatprep.subr.bf16.mxu0 0
    %245 = vmatpush2.bf16.msra.mxu0 0
    %246 = vmatprep.mubr.bf16.mxu0 0
    %247 = vmatmul.mubr.bf16.gmra.mxu0 %v142
    %v248 = vpop.f32.mrf.mxu0
    %v249 = vadd.f32 %v164, %v248
    %v250 = vpop.f32.mrf.mxu0
    %v251 = vpop.f32.mrf.mxu0
    %v252 = vpop.f32.mrf.mxu0
    %253 = vdwg.mxu0
    %v254 = vmax.f32 %v249, 0.0
    %v255 = vpack.c.bf16 %v254, %v254
    %v256 = vld [vmem:[#allocation7] sm:$0xf]
    %v257 = vld [vmem:[#allocation7 + $0x4] sm:$0xf]
    %v258 = vld [vmem:[#allocation7 + $0x8] sm:$0xf]
    %v259 = vld [vmem:[#allocation7 + $0xc] sm:$0xf]
    %v260 = vld [vmem:[#allocation7 + $0x10] sm:$0xf]
    %v261 = vld [vmem:[#allocation7 + $0x14] sm:$0xf]
    %v262 = vld [vmem:[#allocation7 + $0x18] sm:$0xf]
    %v263 = vld [vmem:[#allocation7 + $0x1c] sm:$0xf]
    %v264 = vld [vmem:[#allocation7 + $0x20] sm:$0xf]
    %v265 = vld [vmem:[#allocation7 + $0x24] sm:$0xf]
    %v266 = vld [vmem:[#allocation7 + $0x28] sm:$0xf]
    %v267 = vld [vmem:[#allocation7 + $0x2c] sm:$0xf]
    %v268 = vld [vmem:[#allocation7 + $0x30] sm:$0xf]
    %v269 = vld [vmem:[#allocation7 + $0x34] sm:$0xf]
    %v270 = vld [vmem:[#allocation7 + $0x38] sm:$0xf]
    %v271 = vld [vmem:[#allocation7 + $0x3c] sm:$0xf]
    %v272 = vld [vmem:[%s6] sm:$0x1]
    %v274 = vlaneseq
    %v275 = vshrl.u32 %v274, 7
    %v276 = vsub.s32 0, %v275
    %v277 = vrot.slane %v272, %v276
    %v295 = vunpack.c.l.b16 %v256
    %v296 = vunpack.c.l.b16 %v257
    %v297 = vunpack.c.l.b16 %v258
    %v298 = vunpack.c.l.b16 %v259
    %v299 = vunpack.c.l.b16 %v260
    %v300 = vunpack.c.l.b16 %v261
    %v301 = vunpack.c.l.b16 %v262
    %v302 = vunpack.c.l.b16 %v263
    %v303 = vunpack.c.l.b16 %v264
    %v304 = vunpack.c.l.b16 %v265
    %v305 = vunpack.c.l.b16 %v266
    %v306 = vunpack.c.l.b16 %v267
    %v307 = vunpack.c.l.b16 %v268
    %v308 = vunpack.c.l.b16 %v269
    %v309 = vunpack.c.l.b16 %v270
    %v310 = vunpack.c.l.b16 %v271
    %v311 = vpack.c.b16 %v296, %v295
    %v312 = vpack.c.b16 %v298, %v297
    %v313 = vpack.c.b16 %v300, %v299
    %v314 = vpack.c.b16 %v302, %v301
    %v315 = vpack.c.b16 %v304, %v303
    %v316 = vpack.c.b16 %v306, %v305
    %v317 = vpack.c.b16 %v308, %v307
    %v318 = vpack.c.b16 %v310, %v309
    %327 = vmatprep.subr.bf16.mxu0 0
    %328 = vmatpush1.bf16.msra.mxu0 %v318
    %329 = vmatprep.subr.bf16.mxu0 0
    %330 = vmatpush1.bf16.msra.mxu0 %v317
    %331 = vmatprep.subr.bf16.mxu0 0
    %332 = vmatpush1.bf16.msra.mxu0 %v316
    %333 = vmatprep.subr.bf16.mxu0 0
    %334 = vmatpush1.bf16.msra.mxu0 %v315
    %335 = vmatprep.subr.bf16.mxu0 0
    %336 = vmatpush1.bf16.msra.mxu0 %v314
    %337 = vmatprep.subr.bf16.mxu0 0
    %338 = vmatpush1.bf16.msra.mxu0 %v313
    %339 = vmatprep.subr.bf16.mxu0 0
    %340 = vmatpush1.bf16.msra.mxu0 %v312
    %341 = vmatprep.subr.bf16.mxu0 0
    %342 = vmatpush1.bf16.msra.mxu0 %v311
    %343 = vmatprep.subr.bf16.mxu0 0
    %344 = vmatpush2.bf16.msra.mxu0 0
    %345 = vmatprep.subr.bf16.mxu0 0
    %346 = vmatpush2.bf16.msra.mxu0 0
    %347 = vmatprep.subr.bf16.mxu0 0
    %348 = vmatpush2.bf16.msra.mxu0 0
    %349 = vmatprep.subr.bf16.mxu0 0
    %350 = vmatpush2.bf16.msra.mxu0 0
    %351 = vmatprep.subr.bf16.mxu0 0
    %352 = vmatpush2.bf16.msra.mxu0 0
    %353 = vmatprep.subr.bf16.mxu0 0
    %354 = vmatpush2.bf16.msra.mxu0 0
    %355 = vmatprep.subr.bf16.mxu0 0
    %356 = vmatpush2.bf16.msra.mxu0 0
    %357 = vmatprep.subr.bf16.mxu0 0
    %358 = vmatpush2.bf16.msra.mxu0 0
    %359 = vmatprep.mubr.bf16.mxu0 0
    %360 = vmatmul.mubr.bf16.gmra.mxu0 %v255
    %v361 = vpop.f32.mrf.mxu0
    %v362 = vadd.f32 %v277, %v361
    %v363 = vpop.f32.mrf.mxu0
    %v364 = vpop.f32.mrf.mxu0
    %v365 = vpop.f32.mrf.mxu0
    %366 = vdwg.mxu0
    %367 = vst [vmem:[%s7] sm:$0xff] %v362
    // Predicated region
    $region46: #{dqn_forward.1} parent=1 // pred_check
      _
    $region47: #{dqn_forward.1} parent=1 // pred_check_branch
      %369 = sbr.rel (0) target = $region49
    $region48: #{dqn_forward.1} parent=1 // pred_region
      _
    $region49: #{dqn_forward.1} parent=1 // pred_fallthru
      _
    // Predicated region
    $region50: #{dqn_forward.1} parent=1 // pred_check
      _
    $region51: #{dqn_forward.1} parent=1 // pred_check_branch
      %371 = sbr.rel (0) target = $region53
    $region52: #{dqn_forward.1} parent=1 // pred_region
      _
    $region53: #{dqn_forward.1} parent=1 // pred_fallthru
      _
    %372 = vsyncpa [#allocation3], 1
    %373 = vsyncpa [#allocation5], 1
    %374 = vsyncpa [#allocation8], 1

</llo_original>
